<compile_context>
chip_gen: v5e
topology: v5e:2x2
jax: 0.10.0
libtpu: 0.0.40
codegen_flags: <defaults>
</compile_context>

<pallas_src>
from typing import NamedTuple

import numpy as np
import jax
import jax.numpy as jnp
from jax import lax
from jax.experimental import pallas as pl
from jax.experimental.pallas import tpu as pltpu


def _round_up(x, m):
    return ((x + m - 1) // m) * m


def _softplus(z):
    # Numerically stable softplus: max(z, 0) + log1p(exp(-|z|))
    return jnp.maximum(z, 0.0) + jnp.log1p(jnp.exp(-jnp.abs(z)))


# ---------------------------------------------------------------------------
# Kernels
# ---------------------------------------------------------------------------
def _ln_kernel_single(x_ref, w_ref, b_ref, o_ref):
    """Whole contraction in one step: dot + bias + softplus fused."""
    acc = lax.dot_general(
        x_ref[...], w_ref[...],
        dimension_numbers=(((1,), (1,)), ((), ())),   # x @ w.T (trans_b)
        preferred_element_type=jnp.float32,
    )
    o_ref[...] = _softplus(acc + b_ref[...]).astype(o_ref.dtype)


def _ln_kernel_ktiled(x_ref, w_ref, b_ref, o_ref):
    """K-tiled contraction; accumulate directly into the resident f32 output."""
    k = pl.program_id(1)

    @pl.when(k == 0)
    def _():
        o_ref[...] = jnp.zeros_like(o_ref)

    o_ref[...] += lax.dot_general(
        x_ref[...], w_ref[...],
        dimension_numbers=(((1,), (1,)), ((), ())),   # x @ w.T (trans_b)
        preferred_element_type=jnp.float32,
    )

    @pl.when(k == pl.num_programs(1) - 1)
    def _():
        z = o_ref[...] + b_ref[...]
        o_ref[...] = _softplus(z).astype(o_ref.dtype)


# ---------------------------------------------------------------------------
# One-time parameter preparation (hoisted out of the forward hot path)
# ---------------------------------------------------------------------------
class LNParams(NamedTuple):
    w: jax.Array       # (u_pad, d_pad), compute dtype, native (units, D) layout
    b: jax.Array       # (1, u_pad), float32
    n_units: int
    d: int
    d_pad: int
    tk: int
    nk: int


def _choose_k_tiling(d, u_pad, itemsize, block_k):
    """Pick the K tile. Single step if double-buffered x+w tiles (at the
    largest batch tile) comfortably fit scoped VMEM on all chips."""
    tm_max = 256
    single_step_bytes = 2 * (tm_max + u_pad) * d * itemsize
    if single_step_bytes <= 8 * 1024 * 1024:          # safe for v5e's 16 MiB default
        return d, d, 1                                 # tk = d, no padding of D needed
    tk = min(_round_up(block_k, 128), _round_up(d, 128))
    d_pad = _round_up(d, tk)
    return tk, d_pad, d_pad // tk


def prepare_ln_params(w, b, *, compute_dtype=jnp.bfloat16, block_k=2048):
    """Cast + pad the Linear parameters into the kernel layout ONCE.

    w: (n_units, D) -- PyTorch nn.Linear weight layout.  b: (n_units,)
    The unit dim is only sublane-padded (8 for f32, 16 for bf16); the weight
    stream is never lane-padded to 128.
    """
    u, d = w.shape
    itemsize = jnp.dtype(compute_dtype).itemsize
    sub = 16 if itemsize == 2 else 8
    u_pad = _round_up(u, sub)
    tk, d_pad, nk = _choose_k_tiling(d, u_pad, itemsize, block_k)

    w_p = jnp.pad(w.astype(compute_dtype), ((0, u_pad - u), (0, d_pad - d)))
    b_p = jnp.pad(b.astype(jnp.float32), (0, u_pad - u)).reshape(1, u_pad)
    return LNParams(w_p, b_p, u, d, d_pad, tk, nk)


# ---------------------------------------------------------------------------
# Forward
# ---------------------------------------------------------------------------
def ln_forward(x, params: LNParams):
    """LN.forward: softplus(flatten(x) @ W^T + b).  Output dtype float32."""
    n = x.shape[0]
    d = int(np.prod(x.shape[1:]))
    assert d == params.d, "input feature size does not match prepared params"

    compute_dtype = params.w.dtype
    u_pad, d_pad = params.w.shape
    tk, nk = params.tk, params.nk

    # Per-call layout plumbing only: flatten + cast (+ pad D only if K-tiled).
    x2 = x.reshape(n, d).astype(compute_dtype)
    if d_pad != d:
        x2 = jnp.pad(x2, ((0, 0), (0, d_pad - d)))

    # Batch tiling: bounded VMEM + a "parallel" axis for megacore / v7x 2-TC.
    if n <= 256:
        tm, n_pad = n, n
    else:
        tm = 256
        n_pad = _round_up(n, tm)
        if n_pad != n:
            x2 = jnp.pad(x2, ((0, n_pad - n), (0, 0)))
    nm = n_pad // tm

    if nk == 1:
        kernel = _ln_kernel_single
        grid = (nm,)
        in_specs = [
            pl.BlockSpec((tm, d_pad), lambda i: (i, 0)),        # x slab tile
            pl.BlockSpec((u_pad, d_pad), lambda i: (0, 0)),     # full weight (resident)
            pl.BlockSpec((1, u_pad), lambda i: (0, 0)),         # bias (resident)
        ]
        out_specs = pl.BlockSpec((tm, u_pad), lambda i: (i, 0))
        dim_sem = ("parallel",)
    else:
        kernel = _ln_kernel_ktiled
        grid = (nm, nk)
        in_specs = [
            pl.BlockSpec((tm, tk), lambda i, k: (i, k)),        # x tile
            pl.BlockSpec((u_pad, tk), lambda i, k: (0, k)),     # weight K tile
            pl.BlockSpec((1, u_pad), lambda i, k: (0, 0)),      # bias (resident)
        ]
        out_specs = pl.BlockSpec((tm, u_pad), lambda i, k: (i, 0))
        dim_sem = ("parallel", "arbitrary")

    out = pl.pallas_call(
        kernel,
        out_shape=jax.ShapeDtypeStruct((n_pad, u_pad), jnp.float32),
        grid=grid,
        in_specs=in_specs,
        out_specs=out_specs,
        compiler_params=pltpu.CompilerParams(dimension_semantics=dim_sem),
    )(x2, params.w, params.b)

    return out[:n, :params.n_units]


if __name__ == "__main__":
    # Small shapes consistent with the module: batch=2, img_shape=(4, 16, 16),
    # n_units=5.  D = 4*16*16 = 1024 -> single fused step (nk=1), no K grid.
    key = jax.random.PRNGKey(0)
    kx, kw, kb = jax.random.split(key, 3)

    n_units = 5
    x = jax.random.normal(kx, (2, 4, 16, 16), dtype=jnp.float32)
    d = 4 * 16 * 16
    w = jax.random.normal(kw, (n_units, d), dtype=jnp.float32) * 0.02
    b = jax.random.normal(kb, (n_units,), dtype=jnp.float32) * 0.1

    # TODO(synk): nn.Dropout with drop_p > 0 in training mode is not modeled;
    # the module default drop_p=0 (and eval mode) makes it an exact identity.

    # One-time parameter prep (hoisted out of the per-call hot path).
    params = prepare_ln_params(w, b, compute_dtype=jnp.bfloat16)

    y = ln_forward(x, params)
    y = jax.block_until_ready(y)

    # Pure-JAX f32 reference: softplus(flatten(x) @ W^T + b).
    ref = jax.nn.softplus(x.reshape(2, -1) @ w.T + b)
    assert y.shape == (2, n_units) and y.dtype == jnp.float32
    # bf16 inputs / f32 accumulation -> small rounding difference vs f32 ref.
    assert jnp.allclose(y, ref, atol=2e-2, rtol=2e-2), float(jnp.max(jnp.abs(y - ref)))

    print("KERNEL_OK")
</pallas_src>

<mosaic_0001>
module attributes {stable_mosaic.version = 11 : i64} {
  func.func @_ln_kernel_single(%arg0: i32, %arg1: memref<2x1024xbf16, #tpu.memory_space<vmem>>, %arg2: memref<16x1024xbf16, #tpu.memory_space<vmem>>, %arg3: memref<1x16xf32, #tpu.memory_space<vmem>>, %arg4: memref<2x16xf32, #tpu.memory_space<vmem>>) attributes {dimension_semantics = [#tpu.dimension_semantics<parallel>], iteration_bounds = array<i64: 1>, scalar_prefetch = 0 : i64, scratch_operands = 0 : i64, tpu.core_type = #tpu.core_type<tc>, window_params = [{transform_indices = @transform_0, window_bounds = array<i64: 2, 1024>}, {pipeline_mode = #tpu.pipeline_mode<synchronous>, transform_indices = @transform_1, window_bounds = array<i64: 16, 1024>}, {pipeline_mode = #tpu.pipeline_mode<synchronous>, transform_indices = @transform_2, window_bounds = array<i64: 1, 16>}, {transform_indices = @transform_3, window_bounds = array<i64: 2, 16>}]} {
    %c0 = arith.constant 0 : index
    %c0_0 = arith.constant 0 : index
    %0 = vector.load %arg1[%c0, %c0_0] : memref<2x1024xbf16, #tpu.memory_space<vmem>>, vector<2x1024xbf16>
    %c0_1 = arith.constant 0 : index
    %c0_2 = arith.constant 0 : index
    %1 = vector.load %arg2[%c0_1, %c0_2] : memref<16x1024xbf16, #tpu.memory_space<vmem>>, vector<16x1024xbf16>
    %cst = arith.constant dense<0.000000e+00> : vector<2x16xf32>
    %2 = tpu.matmul %0, %1, %cst {dimension_numbers = #tpu.dot_dimension_numbers<[1], [1], [0], [0], [0, 0, 1, 0], [], []>} : vector<2x1024xbf16>, vector<16x1024xbf16>, vector<2x16xf32> -> vector<2x16xf32>
    %c0_3 = arith.constant 0 : index
    %c0_4 = arith.constant 0 : index
    %3 = vector.load %arg3[%c0_3, %c0_4] : memref<1x16xf32, #tpu.memory_space<vmem>>, vector<1x16xf32>
    %4 = vector.broadcast %3 : vector<1x16xf32> to vector<2x16xf32>
    %5 = arith.addf %2, %4 : vector<2x16xf32>
    %cst_5 = arith.constant 0.000000e+00 : f32
    %6 = vector.broadcast %cst_5 : f32 to vector<2x16xf32>
    %7 = arith.maximumf %5, %6 : vector<2x16xf32>
    %8 = math.absf %5 : vector<2x16xf32>
    %cst_6 = arith.constant 0.000000e+00 : f32
    %9 = vector.broadcast %cst_6 : f32 to vector<2x16xf32>
    %10 = arith.subf %9, %8 : vector<2x16xf32>
    %11 = math.exp %10 : vector<2x16xf32>
    %12 = math.log1p %11 : vector<2x16xf32>
    %13 = arith.addf %7, %12 : vector<2x16xf32>
    %c0_7 = arith.constant 0 : index
    %c0_8 = arith.constant 0 : index
    %14 = vector.load %arg4[%c0_7, %c0_8] : memref<2x16xf32, #tpu.memory_space<vmem>>, vector<2x16xf32>
    tpu.vector_store %arg4[%c0_7, %c0_8], %13 {strides = array<i32>} : memref<2x16xf32, #tpu.memory_space<vmem>>, vector<2x16xf32>,
    return
  }
  func.func @transform_0(%arg0: i32) -> (i32, i32) {
    %c0_i32 = arith.constant 0 : i32
    %c0_i32_0 = arith.constant 0 : i32
    return %arg0, %c0_i32 : i32, i32
  }
  func.func @transform_1(%arg0: i32) -> (i32, i32) {
    %c0_i32 = arith.constant 0 : i32
    %c0_i32_0 = arith.constant 0 : i32
    %c0_i32_1 = arith.constant 0 : i32
    return %c0_i32, %c0_i32_0 : i32, i32
  }
  func.func @transform_2(%arg0: i32) -> (i32, i32) {
    %c0_i32 = arith.constant 0 : i32
    %c0_i32_0 = arith.constant 0 : i32
    %c0_i32_1 = arith.constant 0 : i32
    return %c0_i32, %c0_i32_0 : i32, i32
  }
  func.func @transform_3(%arg0: i32) -> (i32, i32) {
    %c0_i32 = arith.constant 0 : i32
    %c0_i32_0 = arith.constant 0 : i32
    return %arg0, %c0_i32 : i32, i32
  }
}

</mosaic_0001>

<llo_original>
// kernel: tpu_custom_call.1
$region0: #{tpu_custom_call.1}
  #allocation0 [shape = 'u32[]', space=smem, size = 0x4, offset = 0x4, fixed_abs, tag = 'smem constant byte address 0x4 - core index']
  #allocation1 [shape = 'u32[72,128]{1,0:T(1,128)}', space=vmem, size = 0x9000, scoped, tag = 'internal scratch']
  %s0 = inlined_call_operand.hbm [shape: bf16[2,1024], index: 0, kind: input, shape index: {}]
  %s1 = inlined_call_operand.hbm [shape: bf16[16,1024], index: 1, kind: input, shape index: {}]
  %s2 = inlined_call_operand.vmem [shape: f32[1,16], index: 2, kind: input, shape index: {}]
  %s3 = inlined_call_operand.hbm [shape: f32[2,16], index: 3, kind: output, shape index: {}]
  %s4 = sld [smem:[#allocation0]]
  $region30: #{tpu_custom_call.1} parent=0
    _
  %s6 = ssub.s32 1, %s4
  %s7 = scalar_select 0, %s6, %s4
  $region1: #{tpu_custom_call.1} parent=0
    #allocation2 [shape = 'u8[4096]{0}', space=vmem, size = 0x1000, scoped, tag = 'input window, operand 0, single buffered']
    #allocation3 [shape = 's32[1]{0}', space=sflag, size = 0x4, scoped, tag = 'scoped memory for tpu_custom_call.1']
    #allocation4 [shape = 's32[1]{0}', space=sflag, size = 0x4, scoped, tag = 'scoped memory for tpu_custom_call.1']
    #allocation5 [shape = 'u8[32768]{0}', space=vmem, size = 0x8000, scoped, tag = 'input window, operand 1, single buffered']
    #allocation6 [shape = 's32[1]{0}', space=sflag, size = 0x4, scoped, tag = 'scoped memory for tpu_custom_call.1']
    #allocation7 [shape = 'u8[1024]{0}', space=vmem, size = 0x400, scoped, tag = 'output window, operand 0, single buffered']
    %8 = vsyncpa [#allocation3], 0
    %9 = vsyncpa [#allocation6], 0
    %10 = vsyncpa [#allocation4], 0
    // Predicated region
    $region2: #{tpu_custom_call.1} parent=1 // pred_check
      _
    $region3: #{tpu_custom_call.1} parent=1 // pred_check_branch
      %12 = sbr.rel (0) target = $region5
    $region4: #{tpu_custom_call.1} parent=1 // pred_region
      %14 = vsyncadd [#allocation3], 0
      %s16 = sshll.u32 %s0, 4
      %s17 = int_to_ptr.hbm [resolvable:$true] %s16
      %s18 = sshll.u32 [#allocation2], 4
      %s19 = int_to_ptr.vmem [resolvable:$true] %s18
      %21 = dma.hbm_to_vmem [thread:$0]  %s17, 128, %s19, [#allocation3]
    $region5: #{tpu_custom_call.1} parent=1 // pred_fallthru
      _
    // Predicated region
    $region6: #{tpu_custom_call.1} parent=1 // pred_check
      _
    $region7: #{tpu_custom_call.1} parent=1 // pred_check_branch
      %23 = sbr.rel (0) target = $region9
    $region8: #{tpu_custom_call.1} parent=1 // pred_region
      %25 = vsyncadd [#allocation6], 0
      %s26 = sshll.u32 %s1, 4
      %s27 = int_to_ptr.hbm [resolvable:$true] %s26
      %s28 = sshll.u32 [#allocation5], 4
      %s29 = int_to_ptr.vmem [resolvable:$true] %s28
      %34 = dma.hbm_to_vmem [thread:$0]  %s27, 1024, %s29, [#allocation6], 512, 512, 32
    $region9: #{tpu_custom_call.1} parent=1 // pred_fallthru
      _
    // Predicated region
    $region10: #{tpu_custom_call.1} parent=1 // pred_check
      _
    $region11: #{tpu_custom_call.1} parent=1 // pred_check_branch
      %36 = sbr.rel (0) target = $region13
    $region12: #{tpu_custom_call.1} parent=1 // pred_region
      _
    $region13: #{tpu_custom_call.1} parent=1 // pred_fallthru
      _
    // Predicated region
    $region14: #{tpu_custom_call.1} parent=1 // pred_check
      _
    $region15: #{tpu_custom_call.1} parent=1 // pred_check_branch
      %38 = sbr.rel (0) target = $region17
    $region16: #{tpu_custom_call.1} parent=1 // pred_region
      %40 = dma.done [#allocation3], 128
    $region17: #{tpu_custom_call.1} parent=1 // pred_fallthru
      _
    // Predicated region
    $region18: #{tpu_custom_call.1} parent=1 // pred_check
      _
    $region19: #{tpu_custom_call.1} parent=1 // pred_check_branch
      %42 = sbr.rel (0) target = $region21
    $region20: #{tpu_custom_call.1} parent=1 // pred_region
      %44 = dma.done [#allocation6], 1024
    $region21: #{tpu_custom_call.1} parent=1 // pred_fallthru
      _
    %v46 = vld [vmem:[#allocation2] sm:$0xff]
    %v47 = vld [vmem:[#allocation5] sm:$0xff]
    %v48 = vld [vmem:[#allocation5 + $0x8] sm:$0xff]
    %v49 = vld [vmem:[#allocation5 + $0x10] sm:$0xff]
    %v50 = vld [vmem:[#allocation5 + $0x18] sm:$0xff]
    %v51 = vld [vmem:[#allocation5 + $0x20] sm:$0xff]
    %v52 = vld [vmem:[#allocation5 + $0x28] sm:$0xff]
    %v53 = vld [vmem:[#allocation5 + $0x30] sm:$0xff]
    %v54 = vld [vmem:[#allocation5 + $0x38] sm:$0xff]
    %v55 = vld [vmem:[%s2] sm:$0x1]
    %v57 = vperm.slane %v55, 0
    %60 = vst [vmem:[#allocation1] ss:$9 sm:$0xff] %v46
    %v61 = vld [vmem:[#allocation1] sm:$0xff]
    %v62 = vld [vmem:[#allocation1 + $0x9] sm:$0xff]
    %v63 = vld [vmem:[#allocation1 + $0x12] sm:$0xff]
    %v64 = vld [vmem:[#allocation1 + $0x1b] sm:$0xff]
    %v65 = vld [vmem:[#allocation1 + $0x24] sm:$0xff]
    %v66 = vld [vmem:[#allocation1 + $0x2d] sm:$0xff]
    %v67 = vld [vmem:[#allocation1 + $0x36] sm:$0xff]
    %v68 = vld [vmem:[#allocation1 + $0x3f] sm:$0xff]
    %v85 = vunpack.c.l.b16 %v47
    %v86 = vunpack.c.h.b16 %v47
    %v87 = vunpack.c.l.b16 %v48
    %v88 = vunpack.c.h.b16 %v48
    %v89 = vunpack.c.l.b16 %v49
    %v90 = vunpack.c.h.b16 %v49
    %v91 = vunpack.c.l.b16 %v50
    %v92 = vunpack.c.h.b16 %v50
    %v93 = vunpack.c.l.b16 %v51
    %v94 = vunpack.c.h.b16 %v51
    %v95 = vunpack.c.l.b16 %v52
    %v96 = vunpack.c.h.b16 %v52
    %v97 = vunpack.c.l.b16 %v53
    %v98 = vunpack.c.h.b16 %v53
    %v99 = vunpack.c.l.b16 %v54
    %v100 = vunpack.c.h.b16 %v54
    %v101 = vpack.c.b16 %v93, %v85
    %v102 = vpack.c.b16 %v94, %v86
    %v103 = vpack.c.b16 %v95, %v87
    %v104 = vpack.c.b16 %v96, %v88
    %v105 = vpack.c.b16 %v97, %v89
    %v106 = vpack.c.b16 %v98, %v90
    %v107 = vpack.c.b16 %v99, %v91
    %v108 = vpack.c.b16 %v100, %v92
    %117 = vmatpush.bf16.xpose.msra.mxu0 0
    %118 = vmatpush.bf16.xpose.msra.mxu0 0
    %119 = vmatpush.bf16.xpose.msra.mxu0 0
    %120 = vmatpush.bf16.xpose.msra.mxu0 0
    %121 = vmatpush.bf16.xpose.msra.mxu0 0
    %122 = vmatpush.bf16.xpose.msra.mxu0 0
    %123 = vmatpush.bf16.xpose.msra.mxu0 0
    %124 = vmatpush.bf16.xpose.msra.mxu0 %v101
    %125 = vmatmul.bf16.gmra.mxu0 %v61
    %v126 = vpop.f32.mrf.mxu0
    %v127 = vadd.f32 %v57, %v126
    %v128 = vpop.f32.mrf.mxu0
    %129 = vdwg.mxu0
    %130 = vmatpush.bf16.xpose.msra.mxu0 0
    %131 = vmatpush.bf16.xpose.msra.mxu0 0
    %132 = vmatpush.bf16.xpose.msra.mxu0 0
    %133 = vmatpush.bf16.xpose.msra.mxu0 0
    %134 = vmatpush.bf16.xpose.msra.mxu0 0
    %135 = vmatpush.bf16.xpose.msra.mxu0 0
    %136 = vmatpush.bf16.xpose.msra.mxu0 0
    %137 = vmatpush.bf16.xpose.msra.mxu0 %v102
    %138 = vmatmul.bf16.gmra.mxu0 %v62
    %v139 = vpop.f32.mrf.mxu0
    %v140 = vadd.f32 %v127, %v139
    %v141 = vpop.f32.mrf.mxu0
    %142 = vdwg.mxu0
    %143 = vmatpush.bf16.xpose.msra.mxu0 0
    %144 = vmatpush.bf16.xpose.msra.mxu0 0
    %145 = vmatpush.bf16.xpose.msra.mxu0 0
    %146 = vmatpush.bf16.xpose.msra.mxu0 0
    %147 = vmatpush.bf16.xpose.msra.mxu0 0
    %148 = vmatpush.bf16.xpose.msra.mxu0 0
    %149 = vmatpush.bf16.xpose.msra.mxu0 0
    %150 = vmatpush.bf16.xpose.msra.mxu0 %v103
    %151 = vmatmul.bf16.gmra.mxu0 %v63
    %v152 = vpop.f32.mrf.mxu0
    %v153 = vadd.f32 %v140, %v152
    %v154 = vpop.f32.mrf.mxu0
    %155 = vdwg.mxu0
    %156 = vmatpush.bf16.xpose.msra.mxu0 0
    %157 = vmatpush.bf16.xpose.msra.mxu0 0
    %158 = vmatpush.bf16.xpose.msra.mxu0 0
    %159 = vmatpush.bf16.xpose.msra.mxu0 0
    %160 = vmatpush.bf16.xpose.msra.mxu0 0
    %161 = vmatpush.bf16.xpose.msra.mxu0 0
    %162 = vmatpush.bf16.xpose.msra.mxu0 0
    %163 = vmatpush.bf16.xpose.msra.mxu0 %v104
    %164 = vmatmul.bf16.gmra.mxu0 %v64
    %v165 = vpop.f32.mrf.mxu0
    %v166 = vadd.f32 %v153, %v165
    %v167 = vpop.f32.mrf.mxu0
    %168 = vdwg.mxu0
    %169 = vmatpush.bf16.xpose.msra.mxu0 0
    %170 = vmatpush.bf16.xpose.msra.mxu0 0
    %171 = vmatpush.bf16.xpose.msra.mxu0 0
    %172 = vmatpush.bf16.xpose.msra.mxu0 0
    %173 = vmatpush.bf16.xpose.msra.mxu0 0
    %174 = vmatpush.bf16.xpose.msra.mxu0 0
    %175 = vmatpush.bf16.xpose.msra.mxu0 0
    %176 = vmatpush.bf16.xpose.msra.mxu0 %v105
    %177 = vmatmul.bf16.gmra.mxu0 %v65
    %v178 = vpop.f32.mrf.mxu0
    %v179 = vadd.f32 %v166, %v178
    %v180 = vpop.f32.mrf.mxu0
    %181 = vdwg.mxu0
    %182 = vmatpush.bf16.xpose.msra.mxu0 0
    %183 = vmatpush.bf16.xpose.msra.mxu0 0
    %184 = vmatpush.bf16.xpose.msra.mxu0 0
    %185 = vmatpush.bf16.xpose.msra.mxu0 0
    %186 = vmatpush.bf16.xpose.msra.mxu0 0
    %187 = vmatpush.bf16.xpose.msra.mxu0 0
    %188 = vmatpush.bf16.xpose.msra.mxu0 0
    %189 = vmatpush.bf16.xpose.msra.mxu0 %v106
    %190 = vmatmul.bf16.gmra.mxu0 %v66
    %v191 = vpop.f32.mrf.mxu0
    %v192 = vadd.f32 %v179, %v191
    %v193 = vpop.f32.mrf.mxu0
    %194 = vdwg.mxu0
    %195 = vmatpush.bf16.xpose.msra.mxu0 0
    %196 = vmatpush.bf16.xpose.msra.mxu0 0
    %197 = vmatpush.bf16.xpose.msra.mxu0 0
    %198 = vmatpush.bf16.xpose.msra.mxu0 0
    %199 = vmatpush.bf16.xpose.msra.mxu0 0
    %200 = vmatpush.bf16.xpose.msra.mxu0 0
    %201 = vmatpush.bf16.xpose.msra.mxu0 0
    %202 = vmatpush.bf16.xpose.msra.mxu0 %v107
    %203 = vmatmul.bf16.gmra.mxu0 %v67
    %v204 = vpop.f32.mrf.mxu0
    %v205 = vadd.f32 %v192, %v204
    %v206 = vpop.f32.mrf.mxu0
    %207 = vdwg.mxu0
    %208 = vmatpush.bf16.xpose.msra.mxu0 0
    %209 = vmatpush.bf16.xpose.msra.mxu0 0
    %210 = vmatpush.bf16.xpose.msra.mxu0 0
    %211 = vmatpush.bf16.xpose.msra.mxu0 0
    %212 = vmatpush.bf16.xpose.msra.mxu0 0
    %213 = vmatpush.bf16.xpose.msra.mxu0 0
    %214 = vmatpush.bf16.xpose.msra.mxu0 0
    %215 = vmatpush.bf16.xpose.msra.mxu0 %v108
    %216 = vmatmul.bf16.gmra.mxu0 %v68
    %v217 = vpop.f32.mrf.mxu0
    %v218 = vadd.f32 %v205, %v217
    %v219 = vpop.f32.mrf.mxu0
    %220 = vdwg.mxu0
    %v221 = vmax.f32 %v218, 0.0
    %v222 = vand.u32 2147483647, %v218
    %v223 = vsub.f32 0.0, %v222
    %v224 = vmul.f32 %v223, 1.442695
    %v225 = vpow.pop %v224
    %v226 = vadd.f32 %v225, 1.0
    %v227 = vlog2.pop %v226
    %v228 = vmul.f32 %v227, 0.6931472
    %v229 = vmul.f32 -0.5, %v225
    %v230 = vadd.f32 %v229, 1.0
    %v231 = vmul.f32 %v230, %v225
    %v232 = vand.u32 2147483647, %v225
    %vm233 = vcmp.lt.f32.partialorder %v232, 0.0004427343
    %v234 = vsel %vm233, %v231, %v228
    %v235 = vadd.f32 %v221, %v234
    %vm236 = vcmask 123904
    %237 = vst.msk [vmem:[#allocation7] sm:$0x3] %vm236, %v235
    // Predicated region
    $region22: #{tpu_custom_call.1} parent=1 // pred_check
      _
    $region23: #{tpu_custom_call.1} parent=1 // pred_check_branch
      %239 = sbr.rel (0) target = $region25
    $region24: #{tpu_custom_call.1} parent=1 // pred_region
      %241 = vsyncadd [#allocation4], 0
      %s243 = sshll.u32 [#allocation7], 4
      %s244 = int_to_ptr.vmem [resolvable:$true] %s243
      %s245 = sshll.u32 %s3, 4
      %s246 = int_to_ptr.hbm [resolvable:$true] %s245
      %248 = dma.vmem_to_hbm [thread:$0]  %s244, 32, %s246, [#allocation4]
    $region25: #{tpu_custom_call.1} parent=1 // pred_fallthru
      _
    // Predicated region
    $region26: #{tpu_custom_call.1} parent=1 // pred_check
      _
    $region27: #{tpu_custom_call.1} parent=1 // pred_check_branch
      %250 = sbr.rel (0) target = $region29
    $region28: #{tpu_custom_call.1} parent=1 // pred_region
      %252 = dma.done [#allocation4], 32
    $region29: #{tpu_custom_call.1} parent=1 // pred_fallthru
      _
    %253 = vsyncpa [#allocation3], 1
    %254 = vsyncpa [#allocation6], 1
    %255 = vsyncpa [#allocation4], 1

</llo_original>
